<compile_context>
chip_gen: v7x
topology: tpu7x:2x2x1
jax: 0.10.0
libtpu: 0.0.40
codegen_flags: <defaults>
</compile_context>

<pallas_src>
import jax
import jax.numpy as jnp
from jax.experimental import pallas as pl
from jax.experimental.pallas import tpu as pltpu

CNN_FRAME_NUM = 6


def _make_row_permute_kernel(d0, d1, hw):
    """Returns a kernel whose input rows are d0-major/d1-minor and whose
    output rows are d1-major/d0-minor (both refs are (d0*d1, hw))."""

    def kernel(x_ref, o_ref):
        x = x_ref[...]                       # (d0*d1, hw), lane-dense
        y = jnp.swapaxes(x.reshape(d0, d1, hw), 0, 1)   # (d1, d0, hw)
        o_ref[...] = y.reshape(d1 * d0, hw)

    return kernel


def _compiler_params(block_bytes):
    # Double-buffered input + output block, 4x headroom; cap at half of the
    # physical VMEM of whatever generation we are running on (32 MiB fallback
    # keeps us safe on v7x's 64 MiB per-TC VMEM).
    needed = 2 * 2 * block_bytes
    try:
        cap = int(pltpu.get_tpu_info().vmem_capacity_bytes) // 2
    except Exception:  # pragma: no cover - conservative fallback
        cap = 32 * 1024 * 1024
    vmem_limit = int(min(max(4 * needed, 16 * 1024 * 1024), cap))
    return pltpu.CompilerParams(
        dimension_semantics=("parallel",),
        vmem_limit_bytes=vmem_limit,
    )


def _cost_estimate(x):
    nbytes = int(x.size) * int(x.dtype.itemsize)
    return pl.CostEstimate(flops=0, transcendentals=0, bytes_accessed=2 * nbytes)


def reshape_video_4d(x, frame_num=CNN_FRAME_NUM):
    """(B*T, C, H, W) -> (B, C, T, H, W); matches the 4D branch of forward()."""
    N, C, H, W = x.shape
    assert N % frame_num == 0, "leading dim must be a multiple of frame_num"
    B, T = N // frame_num, frame_num
    HW = H * W
    TC = T * C

    # Metadata-only reshape: rows of xf[b] are t-major / c-minor.
    xf = x.reshape(B, TC, HW)

    block_bytes = TC * HW * x.dtype.itemsize
    out = pl.pallas_call(
        _make_row_permute_kernel(T, C, HW),
        out_shape=jax.ShapeDtypeStruct((B, TC, HW), x.dtype),
        grid=(B,),
        in_specs=[pl.BlockSpec((pl.Squeezed(), TC, HW), lambda b: (b, 0, 0))],
        out_specs=pl.BlockSpec((pl.Squeezed(), TC, HW), lambda b: (b, 0, 0)),
        compiler_params=_compiler_params(block_bytes),
        cost_estimate=_cost_estimate(x),
    )(xf)
    # Output rows are c-major / t-minor -> metadata-only reshape to 5D.
    return out.reshape(B, C, T, H, W)


def reshape_video_5d(x):
    """(B, C, T, H, W) -> (B*T, C, H, W); matches the 5D branch of forward()."""
    B, C, T, H, W = x.shape
    HW = H * W
    CT = C * T

    # Metadata-only reshape: rows of xf[b] are c-major / t-minor.
    xf = x.reshape(B, CT, HW)

    block_bytes = CT * HW * x.dtype.itemsize
    out = pl.pallas_call(
        _make_row_permute_kernel(C, T, HW),
        out_shape=jax.ShapeDtypeStruct((B, CT, HW), x.dtype),
        grid=(B,),
        in_specs=[pl.BlockSpec((pl.Squeezed(), CT, HW), lambda b: (b, 0, 0))],
        out_specs=pl.BlockSpec((pl.Squeezed(), CT, HW), lambda b: (b, 0, 0)),
        compiler_params=_compiler_params(block_bytes),
        cost_estimate=_cost_estimate(x),
    )(xf)
    # Output rows are t-major / c-minor -> metadata-only reshape to 4D.
    return out.reshape(B * T, C, H, W)


def reshape_video(x, frame_num=CNN_FRAME_NUM):
    """Dispatch that mirrors ReshapeVideo.forward."""
    if x.ndim == 4:
        return reshape_video_4d(x, frame_num)
    elif x.ndim == 5:
        return reshape_video_5d(x)
    raise AssertionError("input must be rank 4 or 5")


if __name__ == "__main__":
    key = jax.random.PRNGKey(0)
    B, T, C, H, W = 2, CNN_FRAME_NUM, 4, 16, 16

    # 4D branch: stacked frames (B*T, C, H, W) -> (B, C, T, H, W)
    x4 = jax.random.normal(key, (B * T, C, H, W), dtype=jnp.float32)
    y5 = jax.block_until_ready(reshape_video(x4))
    ref5 = jnp.transpose(x4.reshape(B, T, C, H, W), (0, 2, 1, 3, 4))
    assert y5.shape == (B, C, T, H, W) and y5.dtype == x4.dtype
    assert jnp.array_equal(y5, ref5), "4D branch mismatch"

    # 5D branch: (B, C, T, H, W) -> (B*T, C, H, W); round-trips back to x4
    y4 = jax.block_until_ready(reshape_video(y5))
    ref4 = jnp.transpose(y5, (0, 2, 1, 3, 4)).reshape(-1, C, H, W)
    assert y4.shape == (B * T, C, H, W)
    assert jnp.array_equal(y4, ref4), "5D branch mismatch"
    assert jnp.array_equal(y4, x4), "round-trip mismatch"

    print("KERNEL_OK")
</pallas_src>

<mosaic_0001>
module attributes {stable_mosaic.version = 11 : i64} {
  func.func @kernel(%arg0: i32, %arg1: memref<1x24x256xf32, #tpu.memory_space<vmem>>, %arg2: memref<1x24x256xf32, #tpu.memory_space<vmem>>) attributes {dimension_semantics = [#tpu.dimension_semantics<parallel>], iteration_bounds = array<i64: 2>, scalar_prefetch = 0 : i64, scratch_operands = 0 : i64, tpu.core_type = #tpu.core_type<tc>, window_params = [{transform_indices = @transform_0, window_bounds = array<i64: 1, 24, 256>}, {transform_indices = @transform_1, window_bounds = array<i64: 1, 24, 256>}]} {
    %c0 = arith.constant 0 : index
    %c0_0 = arith.constant 0 : index
    %c0_1 = arith.constant 0 : index
    %0 = vector.load %arg1[%c0, %c0_0, %c0_1] : memref<1x24x256xf32, #tpu.memory_space<vmem>>, vector<1x24x256xf32>
    %1 = vector.shape_cast %0 : vector<1x24x256xf32> to vector<24x256xf32>
    %2 = vector.shape_cast %1 : vector<24x256xf32> to vector<6x4x256xf32>
    %3 = tpu.transpose %2, [1, 0, 2] : vector<6x4x256xf32> -> vector<4x6x256xf32>
    %4 = vector.shape_cast %3 : vector<4x6x256xf32> to vector<24x256xf32>
    %c0_2 = arith.constant 0 : index
    %c0_3 = arith.constant 0 : index
    %c0_4 = arith.constant 0 : index
    %5 = vector.load %arg2[%c0_2, %c0_3, %c0_4] : memref<1x24x256xf32, #tpu.memory_space<vmem>>, vector<1x24x256xf32>
    %6 = vector.shape_cast %5 : vector<1x24x256xf32> to vector<24x256xf32>
    %7 = vector.shape_cast %4 : vector<24x256xf32> to vector<1x24x256xf32>
    tpu.vector_store %arg2[%c0_2, %c0_3, %c0_4], %7 {strides = array<i32>} : memref<1x24x256xf32, #tpu.memory_space<vmem>>, vector<1x24x256xf32>,
    return
  }
  func.func @transform_0(%arg0: i32) -> (i32, i32, i32) {
    %c0_i32 = arith.constant 0 : i32
    %c0_i32_0 = arith.constant 0 : i32
    %c0_i32_1 = arith.constant 0 : i32
    return %arg0, %c0_i32, %c0_i32_0 : i32, i32, i32
  }
  func.func @transform_1(%arg0: i32) -> (i32, i32, i32) {
    %c0_i32 = arith.constant 0 : i32
    %c0_i32_0 = arith.constant 0 : i32
    %c0_i32_1 = arith.constant 0 : i32
    return %arg0, %c0_i32, %c0_i32_0 : i32, i32, i32
  }
}

</mosaic_0001>

<llo_original>
// kernel: tpu_custom_call.1
$region0: #{tpu_custom_call.1}
  #allocation0 [shape = 'u32[]', space=smem, size = 0x4, offset = 0x4, fixed_abs, tag = 'smem constant byte address 0x4 - core index']
  #allocation1 [shape = 'u32[144,128]{1,0:T(1,128)}', space=vmem, size = 0x12000, scoped, tag = 'internal scratch']
  %s0 = inlined_call_operand.hbm [shape: f32[2,24,256], index: 0, kind: input, shape index: {}]
  %s1 = inlined_call_operand.hbm [shape: f32[2,24,256], index: 1, kind: output, shape index: {}]
  %s2 = sld [smem:[#allocation0]]
  $region41: #{tpu_custom_call.1} parent=0
    _
  %s4 = ssub.s32 1, %s2
  %s5 = scalar_select 0, %s4, %s2
  $region1: #{tpu_custom_call.1} parent=0
    #allocation2 [shape = 'u8[49152]{0}', space=vmem, size = 0xc000, scoped, tag = 'input window, operand 0']
    #allocation3 [shape = 's32[2]{0}', space=sflag, size = 0x8, scoped, tag = 'scoped memory for tpu_custom_call.1']
    #allocation4 [shape = 's32[2]{0}', space=sflag, size = 0x8, scoped, tag = 'scoped memory for tpu_custom_call.1']
    #allocation5 [shape = 'u8[49152]{0}', space=vmem, size = 0xc000, scoped, tag = 'output window, operand 0']
    %6 = vsyncpa [#allocation3], 0
    %s7 = scalar_lea.sflag [#allocation3], 1
    %8 = vsyncpa %s7, 0
    %9 = vsyncpa [#allocation4], 0
    %s10 = scalar_lea.sflag [#allocation4], 1
    %11 = vsyncpa %s10, 0
    loop: start=0, step=1, limit=4
    $region2: #{tpu_custom_call.1} parent=1 // loop_pre_header
      _
    $region3: #{tpu_custom_call.1} parent=1 // loop_header
      %s13 = sphi 0, %s17
      %p14 = scmp.ge.s32.totalorder %s13, 4
      %s23 = sphi 0, %s25
      %s26 = sphi 0, %s23
      %s27 = sphi 0, %s26
      %s43 = sphi 0, %s27
      %s49 = sphi 0, %s51
      %s52 = sphi 0, %s49
      %s53 = sphi 0, %s52
      %s69 = sphi 0, %s53
    $region4: #{tpu_custom_call.1} parent=1 // loop_header_branch
      %16 = sbr.rel (%p14) target = $region8
    $region5: #{tpu_custom_call.1} parent=1 // loop_body
      %s18 = ssub.s32 %s13, 1
      %s19 = ssub.s32 %s13, 2
      %s20 = sadd.s32 %s13, 1
      %s21 = ssub.s32 %s13, %s20
      %p22 = scmp.eq.s32.totalorder %s21, 0
      %s24 = sadd.s32 %s23, 1
      %s25 = scalar_select %p22, %s23, %s24
      %p28 = pneg %p22
      %p29 = scmp.eq.s32.totalorder %s13, 1
      %p30 = por %p28, %p29
      %p31 = scmp.ne.s32.totalorder %s23, %s26
      %p32 = scmp.eq.s32.totalorder %s13, 0
      %p33 = por %p31, %p32
      %p34 = scmp.ne.s32.totalorder %s23, %s26
      %p35 = scmp.eq.s32.totalorder %s18, 1
      %p36 = por %p34, %p35
      %p37 = scmp.ne.s32.totalorder %s26, %s27
      %p38 = scmp.eq.s32.totalorder %s18, 0
      %p39 = por %p37, %p38
      %p40 = scmp.ne.s32.totalorder %s26, %s27
      %p41 = scmp.eq.s32.totalorder %s19, 1
      %p42 = por %p40, %p41
      %p44 = scmp.ne.s32.totalorder %s27, %s43
      %p45 = scmp.eq.s32.totalorder %s19, 0
      %p46 = por %p44, %p45
      %s47 = ssub.s32 %s13, %s20
      %p48 = scmp.eq.s32.totalorder %s47, 0
      %s50 = sadd.s32 %s49, 1
      %s51 = scalar_select %p48, %s49, %s50
      %p54 = pneg %p48
      %p55 = scmp.eq.s32.totalorder %s13, 1
      %p56 = por %p54, %p55
      %p57 = scmp.ne.s32.totalorder %s49, %s52
      %p58 = scmp.eq.s32.totalorder %s13, 0
      %p59 = por %p57, %p58
      %p60 = scmp.ne.s32.totalorder %s49, %s52
      %p61 = scmp.eq.s32.totalorder %s18, 1
      %p62 = por %p60, %p61
      %p63 = scmp.ne.s32.totalorder %s52, %s53
      %p64 = scmp.eq.s32.totalorder %s18, 0
      %p65 = por %p63, %p64
      %p66 = scmp.ne.s32.totalorder %s52, %s53
      %p67 = scmp.eq.s32.totalorder %s19, 1
      %p68 = por %p66, %p67
      %p70 = scmp.ne.s32.totalorder %s53, %s69
      %p71 = scmp.eq.s32.totalorder %s19, 0
      %p72 = por %p70, %p71
      %p73 = scmp.le.s32.totalorder 1, %s13
      %p74 = scmp.lt.s32.totalorder %s13, 3
      %p75 = pnand %p73, %p74
      %p76 = pneg %p75
      // Predicated region
      $region9: #{tpu_custom_call.1} parent=5 // pred_check
        _
      $region10: #{tpu_custom_call.1} parent=5 // pred_check_branch
        %78 = sbr.rel (%p75) target = $region12
      $region11: #{tpu_custom_call.1} parent=5 // pred_region
        %s79 = ssub.s32 %s13, 1
      $region12: #{tpu_custom_call.1} parent=5 // pred_fallthru
        _
      %p80 = scmp.lt.s32.totalorder %s13, 2
      // Predicated region
      $region13: #{tpu_custom_call.1} parent=5 // pred_check
        %p81 = pneg %p80
      $region14: #{tpu_custom_call.1} parent=5 // pred_check_branch
        %83 = sbr.rel (%p81) target = $region16
      $region15: #{tpu_custom_call.1} parent=5 // pred_region
        // Predicated region
        $region17: #{tpu_custom_call.1} parent=15 // pred_check
          %p84 = pneg %p33
        $region18: #{tpu_custom_call.1} parent=15 // pred_check_branch
          %86 = sbr.rel (%p84) target = $region20
        $region19: #{tpu_custom_call.1} parent=15 // pred_region
          %s87 = sand.u32 %s23, 1
          %s88 = scalar_lea.sflag [#allocation3], %s87
          %s89 = sand.u32 %s23, 1
          %s90 = smul.addr %s89, 48
          %s91 = scalar_lea.vmem [#allocation2], %s90
          %s93 = ssub.s32 768, 768
          %94 = vsyncadd %s88, %s93
          %s95 = smul.addr %s13, 6
          %s96 = smul.addr %s95, 128
          %s97 = scalar_lea.hbm %s0, %s96
          %s98 = sshll.u32 %s91, 4
          %s99 = int_to_ptr.vmem [resolvable:$true] %s98
          %104 = dma.hbm_to_vmem [thread:$0]  %s97, 768, %s99, %s88, 256, 256, 16
        $region20: #{tpu_custom_call.1} parent=15 // pred_fallthru
          _
      $region16: #{tpu_custom_call.1} parent=5 // pred_fallthru
        _
      %p105 = scmp.le.s32.totalorder 1, %s13
      %p106 = scmp.lt.s32.totalorder %s13, 3
      %p107 = pnand %p105, %p106
      %p108 = pneg %p107
      // Predicated region
      $region21: #{tpu_custom_call.1} parent=5 // pred_check
        _
      $region22: #{tpu_custom_call.1} parent=5 // pred_check_branch
        %110 = sbr.rel (%p107) target = $region24
      $region23: #{tpu_custom_call.1} parent=5 // pred_region
        %s111 = ssub.s32 %s13, 1
        %s112 = sand.u32 %s26, 1
        %s113 = scalar_lea.sflag [#allocation3], %s112
        %s114 = sand.u32 %s26, 1
        %s115 = smul.addr %s114, 48
        %s116 = scalar_lea.vmem [#allocation2], %s115
        // Predicated region
        $region25: #{tpu_custom_call.1} parent=23 // pred_check
          %p117 = pneg %p39
        $region26: #{tpu_custom_call.1} parent=23 // pred_check_branch
          %119 = sbr.rel (%p117) target = $region28
        $region27: #{tpu_custom_call.1} parent=23 // pred_region
          %120 = dma.done %s113, 768
        $region28: #{tpu_custom_call.1} parent=23 // pred_fallthru
          _
        %s121 = sand.u32 %s26, 1
        %s122 = scalar_lea.sflag [#allocation3], %s121
        %s123 = sand.u32 %s26, 1
        %s124 = smul.addr %s123, 48
        %s125 = scalar_lea.vmem [#allocation2], %s124
        %p126 = pneg %p39
        %p127 = pneg %p36
        %p128 = pneg %p65
        %p129 = pneg %p62
        %s130 = sand.u32 %s52, 1
        %s131 = scalar_lea.sflag [#allocation4], %s130
        %s132 = sand.u32 %s52, 1
        %s133 = smul.addr %s132, 48
        %s134 = scalar_lea.vmem [#allocation5], %s133
        %v135 = vld [vmem:[%s116] sm:$0xff]
        %v136 = vld [vmem:[%s116 + $0x8] sm:$0xff]
        %v137 = vld [vmem:[%s116 + $0x10] sm:$0xff]
        %v138 = vld [vmem:[%s116 + $0x18] sm:$0xff]
        %v139 = vld [vmem:[%s116 + $0x20] sm:$0xff]
        %v140 = vld [vmem:[%s116 + $0x28] sm:$0xff]
        %v147 = vcombine.low %v135, %v136
        %v148 = vcombine.high %v135, %v136
        %v149 = vcombine.low %v137, %v138
        %v150 = vcombine.high %v137, %v138
        %v151 = vcombine.low %v139, %v140
        %v152 = vcombine.high %v139, %v140
        %v159 = vcombine.low %v147, %v149
        %v160 = vcombine.high %v147, %v149
        %v162 = vunpack.c.l.s4 1983009808
        %v163 = vunpack.c.0.s8 %v162
        %v164 = vlaneseq
        %v165 = vshrl.u32 %v164, 7
        %v166 = vsub.s32 %v163, %v165
        %v167 = vrot.slane %v159, %v166
        %v169 = vunpack.c.l.s4 1983009808
        %v170 = vunpack.c.0.s8 %v169
        %v171 = vlaneseq
        %v172 = vshrl.u32 %v171, 7
        %v173 = vsub.s32 %v170, %v172
        %v174 = vrot.slane %v160, %v173
        %v175 = vcombine.low %v148, %v150
        %v176 = vcombine.high %v148, %v150
        %v178 = vunpack.c.l.s4 1983009808
        %v179 = vunpack.c.0.s8 %v178
        %v180 = vlaneseq
        %v181 = vshrl.u32 %v180, 7
        %v182 = vsub.s32 %v179, %v181
        %v183 = vrot.slane %v175, %v182
        %v185 = vunpack.c.l.s4 1983009808
        %v186 = vunpack.c.0.s8 %v185
        %v187 = vlaneseq
        %v188 = vshrl.u32 %v187, 7
        %v189 = vsub.s32 %v186, %v188
        %v190 = vrot.slane %v176, %v189
        %v191 = vcombine.low %v167, %v183
        %v192 = vcombine.high %v167, %v183
        %v194 = vunpack.c.l.s4 1934713408
        %v195 = vunpack.c.0.s8 %v194
        %v196 = vlaneseq
        %v197 = vshrl.u32 %v196, 7
        %v198 = vsub.s32 %v195, %v197
        %v199 = vrot.slane %v191, %v198
        %v201 = vunpack.c.l.s4 1934713408
        %v202 = vunpack.c.0.s8 %v201
        %v203 = vlaneseq
        %v204 = vshrl.u32 %v203, 7
        %v205 = vsub.s32 %v202, %v204
        %v206 = vrot.slane %v192, %v205
        %v207 = vcombine.low %v174, %v190
        %v208 = vcombine.high %v174, %v190
        %v210 = vunpack.c.l.s4 1934713408
        %v211 = vunpack.c.0.s8 %v210
        %v212 = vlaneseq
        %v213 = vshrl.u32 %v212, 7
        %v214 = vsub.s32 %v211, %v213
        %v215 = vrot.slane %v207, %v214
        %v217 = vunpack.c.l.s4 1934713408
        %v218 = vunpack.c.0.s8 %v217
        %v219 = vlaneseq
        %v220 = vshrl.u32 %v219, 7
        %v221 = vsub.s32 %v218, %v220
        %v222 = vrot.slane %v208, %v221
        %v223 = vcombine.low %v199, %v215
        %v224 = vcombine.high %v199, %v215
        %v225 = vcombine.low %v206, %v222
        %v226 = vcombine.high %v206, %v222
        %v227 = vcombine.high %v151, 0.0
        %v229 = vunpack.c.l.s4 1983009808
        %v230 = vunpack.c.0.s8 %v229
        %v231 = vlaneseq
        %v232 = vshrl.u32 %v231, 7
        %v233 = vsub.s32 %v230, %v232
        %v234 = vrot.slane %v151, %v233
        %v236 = vunpack.c.l.s4 1983009808
        %v237 = vunpack.c.0.s8 %v236
        %v238 = vlaneseq
        %v239 = vshrl.u32 %v238, 7
        %v240 = vsub.s32 %v237, %v239
        %v241 = vrot.slane %v227, %v240
        %v242 = vcombine.high %v152, 0.0
        %v244 = vunpack.c.l.s4 1983009808
        %v245 = vunpack.c.0.s8 %v244
        %v246 = vlaneseq
        %v247 = vshrl.u32 %v246, 7
        %v248 = vsub.s32 %v245, %v247
        %v249 = vrot.slane %v152, %v248
        %v251 = vunpack.c.l.s4 1983009808
        %v252 = vunpack.c.0.s8 %v251
        %v253 = vlaneseq
        %v254 = vshrl.u32 %v253, 7
        %v255 = vsub.s32 %v252, %v254
        %v256 = vrot.slane %v242, %v255
        %v257 = vcombine.low %v234, %v249
        %v258 = vcombine.high %v234, %v249
        %v260 = vunpack.c.l.s4 1934713408
        %v261 = vunpack.c.0.s8 %v260
        %v262 = vlaneseq
        %v263 = vshrl.u32 %v262, 7
        %v264 = vsub.s32 %v261, %v263
        %v265 = vrot.slane %v257, %v264
        %v267 = vunpack.c.l.s4 1934713408
        %v268 = vunpack.c.0.s8 %v267
        %v269 = vlaneseq
        %v270 = vshrl.u32 %v269, 7
        %v271 = vsub.s32 %v268, %v270
        %v272 = vrot.slane %v258, %v271
        %v273 = vcombine.low %v241, %v256
        %v274 = vcombine.high %v241, %v256
        %v276 = vunpack.c.l.s4 1934713408
        %v277 = vunpack.c.0.s8 %v276
        %v278 = vlaneseq
        %v279 = vshrl.u32 %v278, 7
        %v280 = vsub.s32 %v277, %v279
        %v281 = vrot.slane %v273, %v280
        %v283 = vunpack.c.l.s4 1934713408
        %v284 = vunpack.c.0.s8 %v283
        %v285 = vlaneseq
        %v286 = vshrl.u32 %v285, 7
        %v287 = vsub.s32 %v284, %v286
        %v288 = vrot.slane %v274, %v287
        %v289 = vcombine.low %v265, %v281
        %v290 = vcombine.high %v265, %v281
        %v291 = vcombine.low %v272, %v288
        %v292 = vcombine.high %v272, %v288
        %v302 = vunpack.c.l.s4 1983009808
        %v303 = vunpack.c.0.s8 %v302
        %v304 = vlaneseq
        %v305 = vshrl.u32 %v304, 7
        %v306 = vsub.s32 %v303, %v305
        %v307 = vrot.slane %v223, %v306
        %v308 = vcombine.high %v307, %v307
        %v310 = vunpack.c.l.s4 1983009808
        %v311 = vunpack.c.0.s8 %v310
        %v312 = vlaneseq
        %v313 = vshrl.u32 %v312, 7
        %v314 = vsub.s32 %v311, %v313
        %v315 = vrot.slane %v289, %v314
        %v317 = vunpack.c.l.s4 1983009808
        %v318 = vunpack.c.0.s8 %v317
        %v319 = vlaneseq
        %v320 = vshrl.u32 %v319, 7
        %v321 = vsub.s32 %v318, %v320
        %v322 = vrot.slane %v224, %v321
        %v323 = vcombine.high %v322, %v322
        %v325 = vunpack.c.l.s4 1983009808
        %v326 = vunpack.c.0.s8 %v325
        %v327 = vlaneseq
        %v328 = vshrl.u32 %v327, 7
        %v329 = vsub.s32 %v326, %v328
        %v330 = vrot.slane %v290, %v329
        %v332 = vunpack.c.l.s4 1983009808
        %v333 = vunpack.c.0.s8 %v332
        %v334 = vlaneseq
        %v335 = vshrl.u32 %v334, 7
        %v336 = vsub.s32 %v333, %v335
        %v337 = vrot.slane %v225, %v336
        %v338 = vcombine.high %v337, %v337
        %v340 = vunpack.c.l.s4 1983009808
        %v341 = vunpack.c.0.s8 %v340
        %v342 = vlaneseq
        %v343 = vshrl.u32 %v342, 7
        %v344 = vsub.s32 %v341, %v343
        %v345 = vrot.slane %v291, %v344
        %v347 = vunpack.c.l.s4 1983009808
        %v348 = vunpack.c.0.s8 %v347
        %v349 = vlaneseq
        %v350 = vshrl.u32 %v349, 7
        %v351 = vsub.s32 %v348, %v350
        %v352 = vrot.slane %v226, %v351
        %v353 = vcombine.high %v352, %v352
        %v355 = vunpack.c.l.s4 1983009808
        %v356 = vunpack.c.0.s8 %v355
        %v357 = vlaneseq
        %v358 = vshrl.u32 %v357, 7
        %v359 = vsub.s32 %v356, %v358
        %v360 = vrot.slane %v292, %v359
        %v361 = vcombine.low %v307, %v308
        %v362 = vcombine.low %v315, %v322
        %v364 = vunpack.c.l.s4 1983009808
        %v365 = vunpack.c.0.s8 %v364
        %v366 = vlaneseq
        %v367 = vshrl.u32 %v366, 7
        %v368 = vsub.s32 %v365, %v367
        %v369 = vrot.slane %v361, %v368
        %v371 = vunpack.c.l.s4 1983009808
        %v372 = vunpack.c.0.s8 %v371
        %v373 = vlaneseq
        %v374 = vshrl.u32 %v373, 7
        %v375 = vsub.s32 %v372, %v374
        %v376 = vrot.slane %v362, %v375
        %v377 = vcombine.low %v369, %v376
        %v378 = vcombine.high %v369, %v376
        %v379 = vcombine.low %v323, %v330
        %v380 = vcombine.low %v337, %v338
        %v382 = vunpack.c.l.s4 1983009808
        %v383 = vunpack.c.0.s8 %v382
        %v384 = vlaneseq
        %v385 = vshrl.u32 %v384, 7
        %v386 = vsub.s32 %v383, %v385
        %v387 = vrot.slane %v379, %v386
        %v389 = vunpack.c.l.s4 1983009808
        %v390 = vunpack.c.0.s8 %v389
        %v391 = vlaneseq
        %v392 = vshrl.u32 %v391, 7
        %v393 = vsub.s32 %v390, %v392
        %v394 = vrot.slane %v380, %v393
        %v395 = vcombine.low %v387, %v394
        %v396 = vcombine.high %v387, %v394
        %v397 = vcombine.low %v345, %v352
        %v398 = vcombine.low %v353, %v360
        %v400 = vunpack.c.l.s4 1983009808
        %v401 = vunpack.c.0.s8 %v400
        %v402 = vlaneseq
        %v403 = vshrl.u32 %v402, 7
        %v404 = vsub.s32 %v401, %v403
        %v405 = vrot.slane %v397, %v404
        %v407 = vunpack.c.l.s4 1983009808
        %v408 = vunpack.c.0.s8 %v407
        %v409 = vlaneseq
        %v410 = vshrl.u32 %v409, 7
        %v411 = vsub.s32 %v408, %v410
        %v412 = vrot.slane %v398, %v411
        %v413 = vcombine.low %v405, %v412
        %v414 = vcombine.high %v405, %v412
        %421 = vst [vmem:[%s134] sm:$0xff] %v377
        %422 = vst [vmem:[%s134 + $0x8] sm:$0xff] %v378
        %423 = vst [vmem:[%s134 + $0x10] sm:$0xff] %v395
        %424 = vst [vmem:[%s134 + $0x18] sm:$0xff] %v396
        %425 = vst [vmem:[%s134 + $0x20] sm:$0xff] %v413
        %426 = vst [vmem:[%s134 + $0x28] sm:$0xff] %v414
        %s427 = sand.u32 %s52, 1
        %s428 = scalar_lea.sflag [#allocation4], %s427
        %s429 = sand.u32 %s52, 1
        %s430 = smul.addr %s429, 48
        %s431 = scalar_lea.vmem [#allocation5], %s430
        // Predicated region
        $region29: #{tpu_custom_call.1} parent=23 // pred_check
          %p432 = pneg %p62
        $region30: #{tpu_custom_call.1} parent=23 // pred_check_branch
          %434 = sbr.rel (%p432) target = $region32
        $region31: #{tpu_custom_call.1} parent=23 // pred_region
          %s436 = ssub.s32 768, 768
          %437 = vsyncadd %s428, %s436
          %s438 = smul.addr %s18, 6
          %s439 = smul.addr %s438, 128
          %s440 = scalar_lea.hbm %s1, %s439
          %s441 = sshll.u32 %s431, 4
          %s442 = int_to_ptr.vmem [resolvable:$true] %s441
          %447 = dma.vmem_to_hbm [thread:$0]  %s442, 768, %s440, %s428, 256, 256, 16
        $region32: #{tpu_custom_call.1} parent=23 // pred_fallthru
          _
      $region24: #{tpu_custom_call.1} parent=5 // pred_fallthru
        _
      %p448 = scmp.le.s32.totalorder 2, %s13
      // Predicated region
      $region33: #{tpu_custom_call.1} parent=5 // pred_check
        %p449 = pneg %p448
      $region34: #{tpu_custom_call.1} parent=5 // pred_check_branch
        %451 = sbr.rel (%p449) target = $region36
      $region35: #{tpu_custom_call.1} parent=5 // pred_region
        %s452 = ssub.s32 %s13, 2
        // Predicated region
        $region37: #{tpu_custom_call.1} parent=35 // pred_check
          %p453 = pneg %p68
        $region38: #{tpu_custom_call.1} parent=35 // pred_check_branch
          %455 = sbr.rel (%p453) target = $region40
        $region39: #{tpu_custom_call.1} parent=35 // pred_region
          %s456 = sand.u32 %s53, 1
          %s457 = scalar_lea.sflag [#allocation4], %s456
          %s458 = sand.u32 %s53, 1
          %s459 = smul.addr %s458, 48
          %s460 = scalar_lea.vmem [#allocation5], %s459
          %461 = dma.done %s457, 768
        $region40: #{tpu_custom_call.1} parent=35 // pred_fallthru
          _
      $region36: #{tpu_custom_call.1} parent=5 // pred_fallthru
        _
    $region6: #{tpu_custom_call.1} parent=1 // loop_footer
      %s17 = sadd.s32 1, %s13
    $region7: #{tpu_custom_call.1} parent=1 // loop_footer_branch
      %12 = sbr.rel target = $region3
    $region8: #{tpu_custom_call.1} parent=1 // loop_exit
      _
    %462 = vsyncpa [#allocation3], 1
    %s463 = scalar_lea.sflag [#allocation3], 1
    %464 = vsyncpa %s463, 1
    %465 = vsyncpa [#allocation4], 1
    %s466 = scalar_lea.sflag [#allocation4], 1
    %467 = vsyncpa %s466, 1

</llo_original>
